<compile_context>
chip_gen: v7x
topology: tpu7x:2x2x1
jax: 0.10.0
libtpu: 0.0.40
codegen_flags: <defaults>
</compile_context>

<pallas_src>
import dataclasses

import numpy as np
import jax
import jax.numpy as jnp
from jax.experimental import pallas as pl
from jax.experimental.pallas import tpu as pltpu


# ----------------------------------------------------------------------------
# Static radius geometry (equivalent of RadialAverage.__init__) -- numpy only.
# ----------------------------------------------------------------------------
def build_radial_params(image_size):
    rows = cols = image_size
    idx = np.indices((rows, cols)) - np.array([[[rows // 2]], [[cols // 2]]])
    r = np.sqrt(idx[0] ** 2 + idx[1] ** 2).astype(int)        # (S, S) integer radius
    r_max = int(r.max())
    num_radii = r_max + 1
    radius = np.arange(num_radii).reshape(-1, 1, 1)
    mask = (r[None, :, :] == radius).astype(np.float32)       # (V, S, S) dense (reference only)
    nbin = mask.sum(axis=(1, 2)).astype(np.float32)           # (V,)
    return r.astype(np.int32), mask, nbin, num_radii


# ----------------------------------------------------------------------------
# Host-side tiling plan: spatial tile sizes, tile-rebased radius map, local bin
# count, local->global scatter ids, generation-aware VMEM budget.
# ----------------------------------------------------------------------------
@dataclasses.dataclass(frozen=True)
class RadialPlan:
    tile_h: int
    tile_w: int
    grid: tuple
    v_loc: int                 # padded local-bin count per tile
    num_radii: int
    r_local: jax.Array         # (H, W) int32, tile-rebased radius indices
    bins: jax.Array            # (v_loc, 1, 1) int32, 0..v_loc-1 (resident constant)
    seg_ids: jax.Array         # (T * v_loc,) int32, local bin -> global bin (== V means drop)
    vmem_limit_bytes: int


def plan_radial_tiles(r_np, num_radii, *, batch=2, tile_h=None, tile_w=None,
                      max_pixels_per_tile=16384):
    H, W = r_np.shape

    try:
        vmem_cap = int(pltpu.get_tpu_info().vmem_capacity_bytes)
    except Exception:  # pragma: no cover - conservative fallback (v7x-sized)
        vmem_cap = 64 * 1024 * 1024
    temp_budget = int(vmem_cap * 0.45)      # headroom for double-buffered IO + compiler scratch

    if tile_w is None:
        tile_w = 128 if (W % 128 == 0) else W     # lane-aligned if possible, else full width
    assert W % tile_w == 0 and (tile_w % 128 == 0 or tile_w == W)

    def local_range(th):
        ti, tj = H // th, W // tile_w
        rt = r_np.reshape(ti, th, tj, tile_w)
        tmin = rt.min(axis=(1, 3))
        tmax = rt.max(axis=(1, 3))
        return tmin, int((tmax - tmin).max()) + 1

    def temp_bytes(th, vl):
        # (v_loc, th, tile_w) compare/broadcast/select temporaries (~5 live f32-sized
        # copies, conservative) plus double-buffered x / radius tiles.
        return 5 * vl * th * tile_w * 4 + 2 * (3 * batch + 1) * th * tile_w * 4

    if tile_h is None:
        cands = sorted(h for h in range(8, H + 1, 8) if H % h == 0) or [H]
        tile_h = cands[0]
        for th in cands:                                       # ascending: keep largest feasible
            _, vl = local_range(th)
            if th * tile_w <= max_pixels_per_tile and temp_bytes(th, vl) <= temp_budget:
                tile_h = th
    assert H % tile_h == 0 and (tile_h % 8 == 0 or tile_h == H)

    tmin, v_loc = local_range(tile_h)
    v_loc = ((v_loc + 7) // 8) * 8            # tidy multiple of 8; the extra bins carry zero mass

    ti, tj = H // tile_h, W // tile_w
    r_local = (r_np - np.repeat(np.repeat(tmin, tile_h, axis=0),
                                tile_w, axis=1)).astype(np.int32)           # (H, W)

    seg_ids = tmin.reshape(-1, 1) + np.arange(v_loc)[None, :]               # (T, v_loc)
    seg_ids = np.where(seg_ids < num_radii, seg_ids, num_radii).astype(np.int32)

    vmem_limit = min(int(vmem_cap * 0.8),
                     max(32 * 1024 * 1024, 2 * temp_bytes(tile_h, v_loc)))

    bins = np.arange(v_loc, dtype=np.int32).reshape(v_loc, 1, 1)

    return RadialPlan(
        tile_h=int(tile_h), tile_w=int(tile_w), grid=(int(ti), int(tj)),
        v_loc=int(v_loc), num_radii=int(num_radii),
        r_local=jnp.asarray(r_local), bins=jnp.asarray(bins),
        seg_ids=jnp.asarray(seg_ids.reshape(-1)),
        vmem_limit_bytes=int(vmem_limit))


# ----------------------------------------------------------------------------
# Pallas kernel: per-tile luma (VPU) + local radial sums (compare/select +
# sublane/lane reductions on the VPU).  One independent output block per tile.
# ----------------------------------------------------------------------------
def radial_tile_kernel(bins_ref, r_ref, x_ref, out_ref):
    # bins_ref: (V_LOC, 1, 1) int32 -- local bin indices (resident constant)
    # r_ref:    (TILE_H, TILE_W) int32 -- tile-rebased radius index per pixel
    # x_ref:    (B, 3, TILE_H, TILE_W) -- image tile in native NCHW layout
    # out_ref:  (1, B, V_LOC) f32     -- this tile's local radial sums
    x = x_ref[...].astype(jnp.float32)                                   # (B, 3, TH, TW)

    # Luma combine on the VPU.  The reference's 20x scale is applied in the
    # wrapper on the tiny (B, V) profile (the pipeline is linear in mag).
    mag = 0.299 * x[:, 0] + 0.587 * x[:, 1] + 0.114 * x[:, 2]            # (B, TH, TW)

    # Per-tile bin membership, built once and reused for every batch row.
    eq = r_ref[...][None, :, :] == bins_ref[...]                         # (V_LOC, TH, TW)

    # Small-batch contraction on the VPU.  At B <= 4 this beats an MXU dot
    # whose M/N dimension would be B (<2% of a 128/256-wide weight tile) and
    # keeps full f32 precision.  For B >= 8, replace this loop with a bf16
    # one-hot jax.lax.dot_general contracting the flattened pixel axis.
    batch = mag.shape[0]
    for b in range(batch):                                               # static, small
        masked = jnp.where(eq, mag[b][None, :, :], 0.0)                  # (V_LOC, TH, TW)
        out_ref[0, b, :] = masked.sum(axis=1).sum(axis=-1)               # (V_LOC,)


# ----------------------------------------------------------------------------
# Wrapper: pallas_call over independent spatial tiles + tiny (B, V) finalize.
# ----------------------------------------------------------------------------
def radial_average(x_nchw, plan, nbin):
    """x_nchw: (B, 3, H, W); nbin: (V,) f32.  Returns the normalized (B, V) profile."""
    B, C, H, W = x_nchw.shape
    assert C == 3, "only_psd luma path expects 3 channels"
    th, tw = plan.tile_h, plan.tile_w
    ti, tj = plan.grid
    vl = plan.v_loc
    n_tiles = ti * tj

    partials = pl.pallas_call(
        radial_tile_kernel,
        out_shape=jax.ShapeDtypeStruct((n_tiles, B, vl), jnp.float32),
        grid=(ti, tj),
        in_specs=[
            pl.BlockSpec((vl, 1, 1), lambda i, j: (0, 0, 0)),            # bin indices (resident)
            pl.BlockSpec((th, tw), lambda i, j: (i, j)),                 # tile-local radius map
            pl.BlockSpec((B, C, th, tw), lambda i, j: (0, 0, i, j)),     # x tile, native layout
        ],
        out_specs=pl.BlockSpec((1, B, vl), lambda i, j: (i * tj + j, 0, 0)),
        compiler_params=pltpu.CompilerParams(
            dimension_semantics=("parallel", "parallel"),   # no cross-tile coupling
            vmem_limit_bytes=plan.vmem_limit_bytes,
        ),
        cost_estimate=pl.CostEstimate(
            flops=int((1 + 2 * B) * vl * H * W),
            transcendentals=0,
            bytes_accessed=int(x_nchw.size * x_nchw.dtype.itemsize
                               + plan.r_local.size * 4 + n_tiles * B * vl * 4),
        ),
    )(plan.bins, plan.r_local, x_nchw)

    # Tiny finalize in plain JAX: scatter local bins to global bins, apply the
    # 20x luma scale, normalize by bin counts, then global min-max (matches the
    # reference: no eps guard on nbin or on (pmax - pmin)).
    V = plan.num_radii
    data = partials.transpose(0, 2, 1).reshape(n_tiles * vl, B)
    prof = jax.ops.segment_sum(data, plan.seg_ids, num_segments=V + 1)[:V]     # (V, B)
    prof = 20.0 * prof.T / nbin[None, :]                                       # (B, V)
    pmin = jnp.min(prof)
    pmax = jnp.max(prof)
    return (prof - pmin) / (pmax - pmin)


# ----------------------------------------------------------------------------
# Pure-JAX reference (exactly the PyTorch forward semantics, only_psd=True).
# ----------------------------------------------------------------------------
def radial_average_ref(x_nchw, mask, nbin):
    mag = 20.0 * (0.299 * x_nchw[:, 0] + 0.587 * x_nchw[:, 1] + 0.114 * x_nchw[:, 2])
    prof = (mag[:, None, :, :] * mask[None, :, :, :]).sum(axis=(2, 3)) / nbin[None, :]
    return (prof - prof.min()) / (prof.max() - prof.min())


if __name__ == "__main__":
    B, C, S = 2, 3, 16  # batch=2, RGB, 16x16 images

    r_np, mask_np, nbin_np, V = build_radial_params(S)
    nbin = jnp.asarray(nbin_np)

    # tile_h=8 -> grid=(2, 1): exercises the multi-tile / local-rebasing /
    # segment-scatter path even at this toy size (the default planner would
    # collapse it to a single tile).
    plan = plan_radial_tiles(r_np, V, batch=B, tile_h=8)

    key = jax.random.PRNGKey(0)
    x = jax.random.uniform(key, (B, C, S, S), dtype=jnp.float32)

    out = radial_average(x, plan, nbin)
    out = jax.block_until_ready(out)

    ref = radial_average_ref(x, jnp.asarray(mask_np), nbin)
    assert out.shape == (B, V)
    np.testing.assert_allclose(np.asarray(out), np.asarray(ref), rtol=1e-4, atol=1e-4)

    print("KERNEL_OK")
</pallas_src>

<mosaic_0001>
module attributes {stable_mosaic.version = 11 : i64} {
  func.func @radial_tile_kernel(%arg0: i32, %arg1: i32, %arg2: memref<16x1x1xi32, #tpu.memory_space<vmem>>, %arg3: memref<8x16xi32, #tpu.memory_space<vmem>>, %arg4: memref<2x3x8x16xf32, #tpu.memory_space<vmem>>, %arg5: memref<1x2x16xf32, #tpu.memory_space<vmem>>) attributes {dimension_semantics = [#tpu.dimension_semantics<parallel>, #tpu.dimension_semantics<parallel>], iteration_bounds = array<i64: 2, 1>, scalar_prefetch = 0 : i64, scratch_operands = 0 : i64, tpu.core_type = #tpu.core_type<tc>, window_params = [{pipeline_mode = #tpu.pipeline_mode<synchronous>, transform_indices = @transform_0, window_bounds = array<i64: 16, 1, 1>}, {transform_indices = @transform_1, window_bounds = array<i64: 8, 16>}, {transform_indices = @transform_2, window_bounds = array<i64: 2, 3, 8, 16>}, {transform_indices = @transform_3, window_bounds = array<i64: 1, 2, 16>}]} {
    %c0 = arith.constant 0 : index
    %c0_0 = arith.constant 0 : index
    %c0_1 = arith.constant 0 : index
    %c0_2 = arith.constant 0 : index
    %0 = vector.load %arg4[%c0, %c0_0, %c0_1, %c0_2] : memref<2x3x8x16xf32, #tpu.memory_space<vmem>>, vector<2x3x8x16xf32>
    %1 = vector.extract_strided_slice %0 {offsets = [0, 0, 0, 0], sizes = [2, 1, 8, 16], strides = [1, 1, 1, 1]} : vector<2x3x8x16xf32> to vector<2x1x8x16xf32>
    %2 = vector.shape_cast %1 : vector<2x1x8x16xf32> to vector<2x8x16xf32>
    %cst = arith.constant 2.990000e-01 : f32
    %3 = vector.broadcast %cst : f32 to vector<2x8x16xf32>
    %4 = arith.mulf %3, %2 : vector<2x8x16xf32>
    %5 = vector.extract_strided_slice %0 {offsets = [0, 1, 0, 0], sizes = [2, 1, 8, 16], strides = [1, 1, 1, 1]} : vector<2x3x8x16xf32> to vector<2x1x8x16xf32>
    %6 = vector.shape_cast %5 : vector<2x1x8x16xf32> to vector<2x8x16xf32>
    %cst_3 = arith.constant 5.870000e-01 : f32
    %7 = vector.broadcast %cst_3 : f32 to vector<2x8x16xf32>
    %8 = arith.mulf %7, %6 : vector<2x8x16xf32>
    %9 = arith.addf %4, %8 : vector<2x8x16xf32>
    %10 = vector.extract_strided_slice %0 {offsets = [0, 2, 0, 0], sizes = [2, 1, 8, 16], strides = [1, 1, 1, 1]} : vector<2x3x8x16xf32> to vector<2x1x8x16xf32>
    %11 = vector.shape_cast %10 : vector<2x1x8x16xf32> to vector<2x8x16xf32>
    %cst_4 = arith.constant 1.140000e-01 : f32
    %12 = vector.broadcast %cst_4 : f32 to vector<2x8x16xf32>
    %13 = arith.mulf %12, %11 : vector<2x8x16xf32>
    %14 = arith.addf %9, %13 : vector<2x8x16xf32>
    %c0_5 = arith.constant 0 : index
    %c0_6 = arith.constant 0 : index
    %15 = vector.load %arg3[%c0_5, %c0_6] : memref<8x16xi32, #tpu.memory_space<vmem>>, vector<8x16xi32>
    %16 = vector.shape_cast %15 : vector<8x16xi32> to vector<1x8x16xi32>
    %c0_7 = arith.constant 0 : index
    %c0_8 = arith.constant 0 : index
    %c0_9 = arith.constant 0 : index
    %17 = vector.load %arg2[%c0_7, %c0_8, %c0_9] : memref<16x1x1xi32, #tpu.memory_space<vmem>>, vector<16x1x1xi32>
    %18 = vector.broadcast %16 : vector<1x8x16xi32> to vector<16x8x16xi32>
    %19 = vector.broadcast %17 : vector<16x1x1xi32> to vector<16x8x16xi32>
    %20 = arith.cmpi eq, %18, %19 : vector<16x8x16xi32>
    %21 = vector.extract_strided_slice %14 {offsets = [0, 0, 0], sizes = [1, 8, 16], strides = [1, 1, 1]} : vector<2x8x16xf32> to vector<1x8x16xf32>
    %22 = vector.shape_cast %21 : vector<1x8x16xf32> to vector<8x16xf32>
    %23 = vector.shape_cast %22 : vector<8x16xf32> to vector<1x8x16xf32>
    %cst_10 = arith.constant 0.000000e+00 : f32
    %24 = vector.shape_cast %23 : vector<1x8x16xf32> to vector<1x8x16xf32>
    %25 = vector.broadcast %24 : vector<1x8x16xf32> to vector<16x8x16xf32>
    %26 = vector.broadcast %cst_10 : f32 to vector<16x8x16xf32>
    %27 = arith.select %20, %25, %26 : vector<16x8x16xi1>, vector<16x8x16xf32>
    %cst_11 = arith.constant dense<0.000000e+00> : vector<16x16xf32>
    %28 = vector.multi_reduction <add>, %27, %cst_11 [1] : vector<16x8x16xf32> to vector<16x16xf32>
    %cst_12 = arith.constant dense<0.000000e+00> : vector<16xf32>
    %29 = vector.multi_reduction <add>, %28, %cst_12 [1] : vector<16x16xf32> to vector<16xf32>
    %c0_13 = arith.constant 0 : index
    %c0_14 = arith.constant 0 : index
    %c0_15 = arith.constant 0 : index
    %30 = vector.load %arg5[%c0_13, %c0_14, %c0_15] : memref<1x2x16xf32, #tpu.memory_space<vmem>>, vector<1x1x16xf32>
    %31 = vector.shape_cast %30 : vector<1x1x16xf32> to vector<16xf32>
    %32 = vector.shape_cast %29 : vector<16xf32> to vector<1x1x16xf32>
    tpu.vector_store %arg5[%c0_13, %c0_14, %c0_15], %32 {strides = array<i32>} : memref<1x2x16xf32, #tpu.memory_space<vmem>>, vector<1x1x16xf32>,
    %33 = vector.extract_strided_slice %14 {offsets = [1, 0, 0], sizes = [1, 8, 16], strides = [1, 1, 1]} : vector<2x8x16xf32> to vector<1x8x16xf32>
    %34 = vector.shape_cast %33 : vector<1x8x16xf32> to vector<8x16xf32>
    %35 = vector.shape_cast %34 : vector<8x16xf32> to vector<1x8x16xf32>
    %cst_16 = arith.constant 0.000000e+00 : f32
    %36 = vector.shape_cast %35 : vector<1x8x16xf32> to vector<1x8x16xf32>
    %37 = vector.broadcast %36 : vector<1x8x16xf32> to vector<16x8x16xf32>
    %38 = vector.broadcast %cst_16 : f32 to vector<16x8x16xf32>
    %39 = arith.select %20, %37, %38 : vector<16x8x16xi1>, vector<16x8x16xf32>
    %cst_17 = arith.constant dense<0.000000e+00> : vector<16x16xf32>
    %40 = vector.multi_reduction <add>, %39, %cst_17 [1] : vector<16x8x16xf32> to vector<16x16xf32>
    %cst_18 = arith.constant dense<0.000000e+00> : vector<16xf32>
    %41 = vector.multi_reduction <add>, %40, %cst_18 [1] : vector<16x16xf32> to vector<16xf32>
    %c0_19 = arith.constant 0 : index
    %c1 = arith.constant 1 : index
    %c0_20 = arith.constant 0 : index
    %42 = vector.load %arg5[%c0_19, %c1, %c0_20] : memref<1x2x16xf32, #tpu.memory_space<vmem>>, vector<1x1x16xf32>
    %43 = vector.shape_cast %42 : vector<1x1x16xf32> to vector<16xf32>
    %44 = vector.shape_cast %41 : vector<16xf32> to vector<1x1x16xf32>
    tpu.vector_store %arg5[%c0_19, %c1, %c0_20], %44 {strides = array<i32>} : memref<1x2x16xf32, #tpu.memory_space<vmem>>, vector<1x1x16xf32>,
    return
  }
  func.func @transform_0(%arg0: i32, %arg1: i32) -> (i32, i32, i32) {
    %c0_i32 = arith.constant 0 : i32
    %c0_i32_0 = arith.constant 0 : i32
    %c0_i32_1 = arith.constant 0 : i32
    %c0_i32_2 = arith.constant 0 : i32
    return %c0_i32, %c0_i32_0, %c0_i32_1 : i32, i32, i32
  }
  func.func @transform_1(%arg0: i32, %arg1: i32) -> (i32, i32) {
    %c0_i32 = arith.constant 0 : i32
    return %arg0, %arg1 : i32, i32
  }
  func.func @transform_2(%arg0: i32, %arg1: i32) -> (i32, i32, i32, i32) {
    %c0_i32 = arith.constant 0 : i32
    %c0_i32_0 = arith.constant 0 : i32
    %c0_i32_1 = arith.constant 0 : i32
    return %c0_i32, %c0_i32_0, %arg0, %arg1 : i32, i32, i32, i32
  }
  func.func @transform_3(%arg0: i32, %arg1: i32) -> (i32, i32, i32) {
    %c1_i32 = arith.constant 1 : i32
    %0 = arith.muli %arg0, %c1_i32 : i32
    %1 = arith.addi %0, %arg1 : i32
    %c0_i32 = arith.constant 0 : i32
    %c0_i32_0 = arith.constant 0 : i32
    %c0_i32_1 = arith.constant 0 : i32
    return %1, %c0_i32, %c0_i32_0 : i32, i32, i32
  }
}

</mosaic_0001>

<llo_original>
// kernel: tpu_custom_call.1
$region0: #{tpu_custom_call.1}
  #allocation0 [shape = 'u32[]', space=smem, size = 0x4, offset = 0x4, fixed_abs, tag = 'smem constant byte address 0x4 - core index']
  #allocation1 [shape = 'u32[144,128]{1,0:T(1,128)}', space=vmem, size = 0x12000, scoped, tag = 'internal scratch']
  %s0 = inlined_call_operand.vmem [shape: s32[16,1,1], index: 0, kind: input, shape index: {}]
  %s1 = inlined_call_operand.vmem [shape: s32[16,16], index: 1, kind: input, shape index: {}]
  %s2 = inlined_call_operand.hbm [shape: f32[2,3,16,16], index: 2, kind: input, shape index: {}]
  %s3 = inlined_call_operand.hbm [shape: f32[2,2,16], index: 3, kind: output, shape index: {}]
  %s4 = sld [smem:[#allocation0]]
  $region49: #{tpu_custom_call.1} parent=0
    _
  %s6 = ssub.s32 1, %s4
  %s7 = scalar_select 0, %s6, %s4
  $region1: #{tpu_custom_call.1} parent=0
    #allocation2 [shape = 'u8[49152]{0}', space=vmem, size = 0xc000, scoped, tag = 'input window, operand 2']
    #allocation3 [shape = 's32[2]{0}', space=sflag, size = 0x8, scoped, tag = 'scoped memory for tpu_custom_call.1']
    #allocation4 [shape = 's32[2]{0}', space=sflag, size = 0x8, scoped, tag = 'scoped memory for tpu_custom_call.1']
    #allocation5 [shape = 'u8[2048]{0}', space=vmem, size = 0x800, scoped, tag = 'output window, operand 0']
    %8 = vsyncpa [#allocation3], 0
    %s9 = scalar_lea.sflag [#allocation3], 1
    %10 = vsyncpa %s9, 0
    %11 = vsyncpa [#allocation4], 0
    %s12 = scalar_lea.sflag [#allocation4], 1
    %13 = vsyncpa %s12, 0
    loop: start=0, step=1, limit=4
    $region2: #{tpu_custom_call.1} parent=1 // loop_pre_header
      _
    $region3: #{tpu_custom_call.1} parent=1 // loop_header
      %s15 = sphi 0, %s19
      %p16 = scmp.ge.s32.totalorder %s15, 4
      %s22 = sphi 0, %s34
      %s23 = sphi 0, %s30
      %s24 = sphi 0, %s22
      %s25 = sphi 0, %s23
      %s26 = sphi 0, %s24
      %s27 = sphi 0, %s25
      %s35 = sphi 0, %s35
      %s37 = sphi 0, %s35
      %s38 = sphi 0, %s37
      %s52 = sphi 0, %s38
      %s60 = sphi 0, %s62
      %s63 = sphi 0, %s60
      %s64 = sphi 0, %s63
      %s80 = sphi 0, %s64
      %s88 = sphi 0, %s90
      %s91 = sphi 0, %s88
      %s92 = sphi 0, %s91
      %s108 = sphi 0, %s92
      %s116 = sphi 0, %s118
      %s119 = sphi 0, %s116
      %s120 = sphi 0, %s119
      %s136 = sphi 0, %s120
    $region4: #{tpu_custom_call.1} parent=1 // loop_header_branch
      %18 = sbr.rel (%p16) target = $region8
    $region5: #{tpu_custom_call.1} parent=1 // loop_body
      %s20 = ssub.s32 %s15, 1
      %s21 = ssub.s32 %s15, 2
      %s28 = sadd.s32 1, %s23
      %p29 = scmp.ge.s32.totalorder %s28, 1
      %s30 = scalar_select %p29, 0, %s28
      %s31 = sadd.s32 1, %s22
      %s32 = scalar_select %p29, %s31, %s22
      %p33 = scmp.ge.s32.totalorder %s32, 2
      %s34 = scalar_select %p33, 0, %s32
      %s36 = sadd.s32 %s35, 1
      %p39 = scmp.eq.s32.totalorder %s15, 1
      %p40 = scmp.ne.s32.totalorder %s35, %s37
      %p41 = scmp.eq.s32.totalorder %s15, 0
      %p42 = por %p40, %p41
      %p43 = scmp.ne.s32.totalorder %s35, %s37
      %p44 = scmp.eq.s32.totalorder %s20, 1
      %p45 = por %p43, %p44
      %p46 = scmp.ne.s32.totalorder %s37, %s38
      %p47 = scmp.eq.s32.totalorder %s20, 0
      %p48 = por %p46, %p47
      %p49 = scmp.ne.s32.totalorder %s37, %s38
      %p50 = scmp.eq.s32.totalorder %s21, 1
      %p51 = por %p49, %p50
      %p53 = scmp.ne.s32.totalorder %s38, %s52
      %p54 = scmp.eq.s32.totalorder %s21, 0
      %p55 = por %p53, %p54
      %s56 = ssub.s32 %s22, %s34
      %s57 = ssub.s32 %s23, %s30
      %s58 = sor.u32 %s56, %s57
      %p59 = scmp.eq.s32.totalorder %s58, 0
      %s61 = sadd.s32 %s60, 1
      %s62 = scalar_select %p59, %s60, %s61
      %p65 = pneg %p59
      %p66 = scmp.eq.s32.totalorder %s15, 1
      %p67 = por %p65, %p66
      %p68 = scmp.ne.s32.totalorder %s60, %s63
      %p69 = scmp.eq.s32.totalorder %s15, 0
      %p70 = por %p68, %p69
      %p71 = scmp.ne.s32.totalorder %s60, %s63
      %p72 = scmp.eq.s32.totalorder %s20, 1
      %p73 = por %p71, %p72
      %p74 = scmp.ne.s32.totalorder %s63, %s64
      %p75 = scmp.eq.s32.totalorder %s20, 0
      %p76 = por %p74, %p75
      %p77 = scmp.ne.s32.totalorder %s63, %s64
      %p78 = scmp.eq.s32.totalorder %s21, 1
      %p79 = por %p77, %p78
      %p81 = scmp.ne.s32.totalorder %s64, %s80
      %p82 = scmp.eq.s32.totalorder %s21, 0
      %p83 = por %p81, %p82
      %s84 = ssub.s32 %s22, %s34
      %s85 = ssub.s32 %s23, %s30
      %s86 = sor.u32 %s84, %s85
      %p87 = scmp.eq.s32.totalorder %s86, 0
      %s89 = sadd.s32 %s88, 1
      %s90 = scalar_select %p87, %s88, %s89
      %p93 = pneg %p87
      %p94 = scmp.eq.s32.totalorder %s15, 1
      %p95 = por %p93, %p94
      %p96 = scmp.ne.s32.totalorder %s88, %s91
      %p97 = scmp.eq.s32.totalorder %s15, 0
      %p98 = por %p96, %p97
      %p99 = scmp.ne.s32.totalorder %s88, %s91
      %p100 = scmp.eq.s32.totalorder %s20, 1
      %p101 = por %p99, %p100
      %p102 = scmp.ne.s32.totalorder %s91, %s92
      %p103 = scmp.eq.s32.totalorder %s20, 0
      %p104 = por %p102, %p103
      %p105 = scmp.ne.s32.totalorder %s91, %s92
      %p106 = scmp.eq.s32.totalorder %s21, 1
      %p107 = por %p105, %p106
      %p109 = scmp.ne.s32.totalorder %s92, %s108
      %p110 = scmp.eq.s32.totalorder %s21, 0
      %p111 = por %p109, %p110
      %s112 = sadd.s32 %s22, %s23
      %s113 = sadd.s32 %s34, %s30
      %s114 = ssub.s32 %s112, %s113
      %p115 = scmp.eq.s32.totalorder %s114, 0
      %s117 = sadd.s32 %s116, 1
      %s118 = scalar_select %p115, %s116, %s117
      %p121 = pneg %p115
      %p122 = scmp.eq.s32.totalorder %s15, 1
      %p123 = por %p121, %p122
      %p124 = scmp.ne.s32.totalorder %s116, %s119
      %p125 = scmp.eq.s32.totalorder %s15, 0
      %p126 = por %p124, %p125
      %p127 = scmp.ne.s32.totalorder %s116, %s119
      %p128 = scmp.eq.s32.totalorder %s20, 1
      %p129 = por %p127, %p128
      %p130 = scmp.ne.s32.totalorder %s119, %s120
      %p131 = scmp.eq.s32.totalorder %s20, 0
      %p132 = por %p130, %p131
      %p133 = scmp.ne.s32.totalorder %s119, %s120
      %p134 = scmp.eq.s32.totalorder %s21, 1
      %p135 = por %p133, %p134
      %p137 = scmp.ne.s32.totalorder %s120, %s136
      %p138 = scmp.eq.s32.totalorder %s21, 0
      %p139 = por %p137, %p138
      %p140 = scmp.le.s32.totalorder 1, %s15
      %p141 = scmp.lt.s32.totalorder %s15, 3
      %p142 = pnand %p140, %p141
      %p143 = pneg %p142
      // Predicated region
      $region9: #{tpu_custom_call.1} parent=5 // pred_check
        _
      $region10: #{tpu_custom_call.1} parent=5 // pred_check_branch
        %145 = sbr.rel (%p142) target = $region12
      $region11: #{tpu_custom_call.1} parent=5 // pred_region
        %s146 = ssub.s32 %s15, 1
        // Predicated region
        $region13: #{tpu_custom_call.1} parent=11 // pred_check
          %p147 = pneg %p48
        $region14: #{tpu_custom_call.1} parent=11 // pred_check_branch
          %149 = sbr.rel (%p147) target = $region16
        $region15: #{tpu_custom_call.1} parent=11 // pred_region
          _
        $region16: #{tpu_custom_call.1} parent=11 // pred_fallthru
          _
      $region12: #{tpu_custom_call.1} parent=5 // pred_fallthru
        _
      %p150 = scmp.lt.s32.totalorder %s15, 2
      // Predicated region
      $region17: #{tpu_custom_call.1} parent=5 // pred_check
        %p151 = pneg %p150
      $region18: #{tpu_custom_call.1} parent=5 // pred_check_branch
        %153 = sbr.rel (%p151) target = $region20
      $region19: #{tpu_custom_call.1} parent=5 // pred_region
        // Predicated region
        $region21: #{tpu_custom_call.1} parent=19 // pred_check
          %p154 = pneg %p70
        $region22: #{tpu_custom_call.1} parent=19 // pred_check_branch
          %156 = sbr.rel (%p154) target = $region24
        $region23: #{tpu_custom_call.1} parent=19 // pred_region
          %p157 = scmp.lt.s32.totalorder %s22, 1
          %s158 = scalar_select %p157, %s22, 1
          %p159 = scmp.lt.s32.totalorder %s23, 0
          %s160 = scalar_select %p159, %s23, 0
          %s161 = sadd.s32 %s160, %s158
          %s162 = smul.addr %s161, 8
          %s163 = scalar_lea.vmem %s1, %s162
        $region24: #{tpu_custom_call.1} parent=19 // pred_fallthru
          _
        // Predicated region
        $region25: #{tpu_custom_call.1} parent=19 // pred_check
          %p164 = pneg %p98
        $region26: #{tpu_custom_call.1} parent=19 // pred_check_branch
          %166 = sbr.rel (%p164) target = $region28
        $region27: #{tpu_custom_call.1} parent=19 // pred_region
          %s167 = sand.u32 %s88, 1
          %s168 = scalar_lea.sflag [#allocation3], %s167
          %s169 = sand.u32 %s88, 1
          %s170 = smul.addr %s169, 48
          %s171 = scalar_lea.vmem [#allocation2], %s170
          %s173 = ssub.s32 768, 768
          %174 = vsyncadd %s168, %s173
          %s175 = sadd.s32 %s23, %s22
          %s176 = smul.addr %s175, 128
          %s177 = scalar_lea.hbm %s2, %s176
          %s178 = sshll.u32 %s171, 4
          %s179 = int_to_ptr.vmem [resolvable:$true] %s178
          %184 = dma.hbm_to_vmem [thread:$0]  %s177, 768, %s179, %s168, 256, 128, 8
        $region28: #{tpu_custom_call.1} parent=19 // pred_fallthru
          _
      $region20: #{tpu_custom_call.1} parent=5 // pred_fallthru
        _
      %p185 = scmp.le.s32.totalorder 1, %s15
      %p186 = scmp.lt.s32.totalorder %s15, 3
      %p187 = pnand %p185, %p186
      %p188 = pneg %p187
      // Predicated region
      $region29: #{tpu_custom_call.1} parent=5 // pred_check
        _
      $region30: #{tpu_custom_call.1} parent=5 // pred_check_branch
        %190 = sbr.rel (%p187) target = $region32
      $region31: #{tpu_custom_call.1} parent=5 // pred_region
        %s191 = ssub.s32 %s15, 1
        %s192 = sand.u32 %s91, 1
        %s193 = scalar_lea.sflag [#allocation3], %s192
        %s194 = sand.u32 %s91, 1
        %s195 = smul.addr %s194, 48
        %s196 = scalar_lea.vmem [#allocation2], %s195
        // Predicated region
        $region33: #{tpu_custom_call.1} parent=31 // pred_check
          %p197 = pneg %p104
        $region34: #{tpu_custom_call.1} parent=31 // pred_check_branch
          %199 = sbr.rel (%p197) target = $region36
        $region35: #{tpu_custom_call.1} parent=31 // pred_region
          %200 = dma.done %s193, 768
        $region36: #{tpu_custom_call.1} parent=31 // pred_fallthru
          _
        %p201 = pneg %p48
        %p202 = pneg %p45
        %p203 = scmp.lt.s32.totalorder %s24, 1
        %s204 = scalar_select %p203, %s24, 1
        %p205 = scmp.lt.s32.totalorder %s25, 0
        %s206 = scalar_select %p205, %s25, 0
        %s207 = sadd.s32 %s206, %s204
        %s208 = smul.addr %s207, 8
        %s209 = scalar_lea.vmem %s1, %s208
        %p210 = pneg %p76
        %p211 = pneg %p73
        %s212 = sand.u32 %s91, 1
        %s213 = scalar_lea.sflag [#allocation3], %s212
        %s214 = sand.u32 %s91, 1
        %s215 = smul.addr %s214, 48
        %s216 = scalar_lea.vmem [#allocation2], %s215
        %p217 = pneg %p104
        %p218 = pneg %p101
        %p219 = pneg %p132
        %p220 = pneg %p129
        %s221 = sand.u32 %s119, 1
        %s222 = scalar_lea.sflag [#allocation4], %s221
        %s223 = sand.u32 %s119, 1
        %s224 = smul.addr %s223, 2
        %s225 = scalar_lea.vmem [#allocation5], %s224
        %p226 = scmp.lt.s32.totalorder %s24, 1
        %s227 = scalar_select %p226, %s24, 1
        %p228 = scmp.lt.s32.totalorder %s25, 0
        %s229 = scalar_select %p228, %s25, 0
        %s230 = sadd.s32 %s229, %s227
        %s231 = smul.addr %s230, 8
        %s232 = scalar_lea.vmem %s1, %s231
        %s233 = sadd.s32 %s24, %s25
        %v234 = vld [vmem:[%s196] sm:$0xff]
        %v235 = vld [vmem:[%s196 + $0x8] sm:$0xff]
        %v236 = vld [vmem:[%s196 + $0x10] sm:$0xff]
        %v237 = vld [vmem:[%s196 + $0x18] sm:$0xff]
        %v238 = vld [vmem:[%s196 + $0x20] sm:$0xff]
        %v239 = vld [vmem:[%s196 + $0x28] sm:$0xff]
        %v240 = vmul.f32 %v234, 0.299
        %v241 = vmul.f32 %v237, 0.299
        %v242 = vmul.f32 %v235, 0.587
        %v243 = vmul.f32 %v238, 0.587
        %v244 = vadd.f32 %v240, %v242
        %v245 = vadd.f32 %v241, %v243
        %v246 = vmul.f32 %v236, 0.114
        %v247 = vmul.f32 %v239, 0.114
        %v248 = vadd.f32 %v244, %v246
        %v249 = vadd.f32 %v245, %v247
        %v250 = vld [vmem:[%s232] sm:$0xff]
        %v251 = vld [vmem:[%s0] sm:$0x1]
        %v252 = vld [vmem:[%s0 + $0x1] sm:$0x1]
        %v253 = vld [vmem:[%s0 + $0x2] sm:$0x1]
        %v254 = vld [vmem:[%s0 + $0x3] sm:$0x1]
        %v255 = vld [vmem:[%s0 + $0x4] sm:$0x1]
        %v256 = vld [vmem:[%s0 + $0x5] sm:$0x1]
        %v257 = vld [vmem:[%s0 + $0x6] sm:$0x1]
        %v258 = vld [vmem:[%s0 + $0x7] sm:$0x1]
        %v259 = vld [vmem:[%s0 + $0x8] sm:$0x1]
        %v260 = vld [vmem:[%s0 + $0x9] sm:$0x1]
        %v261 = vld [vmem:[%s0 + $0xa] sm:$0x1]
        %v262 = vld [vmem:[%s0 + $0xb] sm:$0x1]
        %v263 = vld [vmem:[%s0 + $0xc] sm:$0x1]
        %v264 = vld [vmem:[%s0 + $0xd] sm:$0x1]
        %v265 = vld [vmem:[%s0 + $0xe] sm:$0x1]
        %v266 = vld [vmem:[%s0 + $0xf] sm:$0x1]
        %v267 = vlaneseq
        %v268 = vshrl.u32 %v267, 7
        %v269 = vsub.s32 0, %v268
        %v270 = vrot.slane %v251, %v269
        %v271 = vlaneseq
        %v272 = vshrl.u32 %v271, 7
        %v273 = vsub.s32 0, %v272
        %v274 = vrot.slane %v252, %v273
        %v275 = vlaneseq
        %v276 = vshrl.u32 %v275, 7
        %v277 = vsub.s32 0, %v276
        %v278 = vrot.slane %v253, %v277
        %v279 = vlaneseq
        %v280 = vshrl.u32 %v279, 7
        %v281 = vsub.s32 0, %v280
        %v282 = vrot.slane %v254, %v281
        %v283 = vlaneseq
        %v284 = vshrl.u32 %v283, 7
        %v285 = vsub.s32 0, %v284
        %v286 = vrot.slane %v255, %v285
        %v287 = vlaneseq
        %v288 = vshrl.u32 %v287, 7
        %v289 = vsub.s32 0, %v288
        %v290 = vrot.slane %v256, %v289
        %v291 = vlaneseq
        %v292 = vshrl.u32 %v291, 7
        %v293 = vsub.s32 0, %v292
        %v294 = vrot.slane %v257, %v293
        %v295 = vlaneseq
        %v296 = vshrl.u32 %v295, 7
        %v297 = vsub.s32 0, %v296
        %v298 = vrot.slane %v258, %v297
        %v299 = vlaneseq
        %v300 = vshrl.u32 %v299, 7
        %v301 = vsub.s32 0, %v300
        %v302 = vrot.slane %v259, %v301
        %v303 = vlaneseq
        %v304 = vshrl.u32 %v303, 7
        %v305 = vsub.s32 0, %v304
        %v306 = vrot.slane %v260, %v305
        %v307 = vlaneseq
        %v308 = vshrl.u32 %v307, 7
        %v309 = vsub.s32 0, %v308
        %v310 = vrot.slane %v261, %v309
        %v311 = vlaneseq
        %v312 = vshrl.u32 %v311, 7
        %v313 = vsub.s32 0, %v312
        %v314 = vrot.slane %v262, %v313
        %v315 = vlaneseq
        %v316 = vshrl.u32 %v315, 7
        %v317 = vsub.s32 0, %v316
        %v318 = vrot.slane %v263, %v317
        %v319 = vlaneseq
        %v320 = vshrl.u32 %v319, 7
        %v321 = vsub.s32 0, %v320
        %v322 = vrot.slane %v264, %v321
        %v323 = vlaneseq
        %v324 = vshrl.u32 %v323, 7
        %v325 = vsub.s32 0, %v324
        %v326 = vrot.slane %v265, %v325
        %v327 = vlaneseq
        %v328 = vshrl.u32 %v327, 7
        %v329 = vsub.s32 0, %v328
        %v330 = vrot.slane %v266, %v329
        %331 = vset.pattern.permute.xlu0 0
        %332 = vperm.xlu0 %331, %v270
        %v333 = vpop.permute.xlu0 %332
        %334 = vset.pattern.permute.xlu0 0
        %335 = vperm.xlu0 %334, %v274
        %v336 = vpop.permute.xlu0 %335
        %337 = vset.pattern.permute.xlu0 0
        %338 = vperm.xlu0 %337, %v278
        %v339 = vpop.permute.xlu0 %338
        %340 = vset.pattern.permute.xlu0 0
        %341 = vperm.xlu0 %340, %v282
        %v342 = vpop.permute.xlu0 %341
        %343 = vset.pattern.permute.xlu0 0
        %344 = vperm.xlu0 %343, %v286
        %v345 = vpop.permute.xlu0 %344
        %346 = vset.pattern.permute.xlu0 0
        %347 = vperm.xlu0 %346, %v290
        %v348 = vpop.permute.xlu0 %347
        %349 = vset.pattern.permute.xlu0 0
        %350 = vperm.xlu0 %349, %v294
        %v351 = vpop.permute.xlu0 %350
        %352 = vset.pattern.permute.xlu0 0
        %353 = vperm.xlu0 %352, %v298
        %v354 = vpop.permute.xlu0 %353
        %355 = vset.pattern.permute.xlu0 0
        %356 = vperm.xlu0 %355, %v302
        %v357 = vpop.permute.xlu0 %356
        %358 = vset.pattern.permute.xlu0 0
        %359 = vperm.xlu0 %358, %v306
        %v360 = vpop.permute.xlu0 %359
        %361 = vset.pattern.permute.xlu0 0
        %362 = vperm.xlu0 %361, %v310
        %v363 = vpop.permute.xlu0 %362
        %364 = vset.pattern.permute.xlu0 0
        %365 = vperm.xlu0 %364, %v314
        %v366 = vpop.permute.xlu0 %365
        %367 = vset.pattern.permute.xlu0 0
        %368 = vperm.xlu0 %367, %v318
        %v369 = vpop.permute.xlu0 %368
        %370 = vset.pattern.permute.xlu0 0
        %371 = vperm.xlu0 %370, %v322
        %v372 = vpop.permute.xlu0 %371
        %373 = vset.pattern.permute.xlu0 0
        %374 = vperm.xlu0 %373, %v326
        %v375 = vpop.permute.xlu0 %374
        %376 = vset.pattern.permute.xlu0 0
        %377 = vperm.xlu0 %376, %v330
        %v378 = vpop.permute.xlu0 %377
        %vm379 = vcmp.eq.s32.totalorder %v250, %v333
        %vm380 = vcmp.eq.s32.totalorder %v250, %v336
        %vm381 = vcmp.eq.s32.totalorder %v250, %v339
        %vm382 = vcmp.eq.s32.totalorder %v250, %v342
        %vm383 = vcmp.eq.s32.totalorder %v250, %v345
        %vm384 = vcmp.eq.s32.totalorder %v250, %v348
        %vm385 = vcmp.eq.s32.totalorder %v250, %v351
        %vm386 = vcmp.eq.s32.totalorder %v250, %v354
        %vm387 = vcmp.eq.s32.totalorder %v250, %v357
        %vm388 = vcmp.eq.s32.totalorder %v250, %v360
        %vm389 = vcmp.eq.s32.totalorder %v250, %v363
        %vm390 = vcmp.eq.s32.totalorder %v250, %v366
        %vm391 = vcmp.eq.s32.totalorder %v250, %v369
        %vm392 = vcmp.eq.s32.totalorder %v250, %v372
        %vm393 = vcmp.eq.s32.totalorder %v250, %v375
        %vm394 = vcmp.eq.s32.totalorder %v250, %v378
        %v395 = vsel %vm379, %v248, 0.0
        %v396 = vsel %vm380, %v248, 0.0
        %v397 = vsel %vm381, %v248, 0.0
        %v398 = vsel %vm382, %v248, 0.0
        %v399 = vsel %vm383, %v248, 0.0
        %v400 = vsel %vm384, %v248, 0.0
        %v401 = vsel %vm385, %v248, 0.0
        %v402 = vsel %vm386, %v248, 0.0
        %v403 = vsel %vm387, %v248, 0.0
        %v404 = vsel %vm388, %v248, 0.0
        %v405 = vsel %vm389, %v248, 0.0
        %v406 = vsel %vm390, %v248, 0.0
        %v407 = vsel %vm391, %v248, 0.0
        %v408 = vsel %vm392, %v248, 0.0
        %v409 = vsel %vm393, %v248, 0.0
        %v410 = vsel %vm394, %v248, 0.0
        %vm411 = vcmask 130048
        %v412 = vsel %vm411, %v395, 0.0
        %v413 = vrot.slane %v412, 4
        %v414 = vadd.f32 %v412, %v413
        %v415 = vrot.slane %v414, 2
        %v416 = vadd.f32 %v414, %v415
        %v417 = vrot.slane %v416, 1
        %v418 = vadd.f32 %v416, %v417
        %v419 = vsel %vm411, %v396, 0.0
        %v420 = vrot.slane %v419, 4
        %v421 = vadd.f32 %v419, %v420
        %v422 = vrot.slane %v421, 2
        %v423 = vadd.f32 %v421, %v422
        %v424 = vrot.slane %v423, 1
        %v425 = vadd.f32 %v423, %v424
        %v426 = vsel %vm411, %v397, 0.0
        %v427 = vrot.slane %v426, 4
        %v428 = vadd.f32 %v426, %v427
        %v429 = vrot.slane %v428, 2
        %v430 = vadd.f32 %v428, %v429
        %v431 = vrot.slane %v430, 1
        %v432 = vadd.f32 %v430, %v431
        %v433 = vsel %vm411, %v398, 0.0
        %v434 = vrot.slane %v433, 4
        %v435 = vadd.f32 %v433, %v434
        %v436 = vrot.slane %v435, 2
        %v437 = vadd.f32 %v435, %v436
        %v438 = vrot.slane %v437, 1
        %v439 = vadd.f32 %v437, %v438
        %v440 = vsel %vm411, %v399, 0.0
        %v441 = vrot.slane %v440, 4
        %v442 = vadd.f32 %v440, %v441
        %v443 = vrot.slane %v442, 2
        %v444 = vadd.f32 %v442, %v443
        %v445 = vrot.slane %v444, 1
        %v446 = vadd.f32 %v444, %v445
        %v447 = vsel %vm411, %v400, 0.0
        %v448 = vrot.slane %v447, 4
        %v449 = vadd.f32 %v447, %v448
        %v450 = vrot.slane %v449, 2
        %v451 = vadd.f32 %v449, %v450
        %v452 = vrot.slane %v451, 1
        %v453 = vadd.f32 %v451, %v452
        %v454 = vsel %vm411, %v401, 0.0
        %v455 = vrot.slane %v454, 4
        %v456 = vadd.f32 %v454, %v455
        %v457 = vrot.slane %v456, 2
        %v458 = vadd.f32 %v456, %v457
        %v459 = vrot.slane %v458, 1
        %v460 = vadd.f32 %v458, %v459
        %v461 = vsel %vm411, %v402, 0.0
        %v462 = vrot.slane %v461, 4
        %v463 = vadd.f32 %v461, %v462
        %v464 = vrot.slane %v463, 2
        %v465 = vadd.f32 %v463, %v464
        %v466 = vrot.slane %v465, 1
        %v467 = vadd.f32 %v465, %v466
        %v468 = vsel %vm411, %v403, 0.0
        %v469 = vrot.slane %v468, 4
        %v470 = vadd.f32 %v468, %v469
        %v471 = vrot.slane %v470, 2
        %v472 = vadd.f32 %v470, %v471
        %v473 = vrot.slane %v472, 1
        %v474 = vadd.f32 %v472, %v473
        %v475 = vsel %vm411, %v404, 0.0
        %v476 = vrot.slane %v475, 4
        %v477 = vadd.f32 %v475, %v476
        %v478 = vrot.slane %v477, 2
        %v479 = vadd.f32 %v477, %v478
        %v480 = vrot.slane %v479, 1
        %v481 = vadd.f32 %v479, %v480
        %v482 = vsel %vm411, %v405, 0.0
        %v483 = vrot.slane %v482, 4
        %v484 = vadd.f32 %v482, %v483
        %v485 = vrot.slane %v484, 2
        %v486 = vadd.f32 %v484, %v485
        %v487 = vrot.slane %v486, 1
        %v488 = vadd.f32 %v486, %v487
        %v489 = vsel %vm411, %v406, 0.0
        %v490 = vrot.slane %v489, 4
        %v491 = vadd.f32 %v489, %v490
        %v492 = vrot.slane %v491, 2
        %v493 = vadd.f32 %v491, %v492
        %v494 = vrot.slane %v493, 1
        %v495 = vadd.f32 %v493, %v494
        %v496 = vsel %vm411, %v407, 0.0
        %v497 = vrot.slane %v496, 4
        %v498 = vadd.f32 %v496, %v497
        %v499 = vrot.slane %v498, 2
        %v500 = vadd.f32 %v498, %v499
        %v501 = vrot.slane %v500, 1
        %v502 = vadd.f32 %v500, %v501
        %v503 = vsel %vm411, %v408, 0.0
        %v504 = vrot.slane %v503, 4
        %v505 = vadd.f32 %v503, %v504
        %v506 = vrot.slane %v505, 2
        %v507 = vadd.f32 %v505, %v506
        %v508 = vrot.slane %v507, 1
        %v509 = vadd.f32 %v507, %v508
        %v510 = vsel %vm411, %v409, 0.0
        %v511 = vrot.slane %v510, 4
        %v512 = vadd.f32 %v510, %v511
        %v513 = vrot.slane %v512, 2
        %v514 = vadd.f32 %v512, %v513
        %v515 = vrot.slane %v514, 1
        %v516 = vadd.f32 %v514, %v515
        %v517 = vsel %vm411, %v410, 0.0
        %v518 = vrot.slane %v517, 4
        %v519 = vadd.f32 %v517, %v518
        %v520 = vrot.slane %v519, 2
        %v521 = vadd.f32 %v519, %v520
        %v522 = vrot.slane %v521, 1
        %v523 = vadd.f32 %v521, %v522
        %vm540 = vcmask 1041409
        %v541 = vsel %vm540, %v425, %v418
        %vm542 = vcmask 1042434
        %v543 = vsel %vm542, %v432, %v541
        %vm544 = vcmask 1043459
        %v545 = vsel %vm544, %v439, %v543
        %vm546 = vcmask 1044484
        %v547 = vsel %vm546, %v446, %v545
        %vm548 = vcmask 1045509
        %v549 = vsel %vm548, %v453, %v547
        %vm550 = vcmask 1046534
        %v551 = vsel %vm550, %v460, %v549
        %vm552 = vcmask 1047559
        %v553 = vsel %vm552, %v467, %v551
        %v554 = vsel %vm540, %v481, %v474
        %v555 = vsel %vm542, %v488, %v554
        %v556 = vsel %vm544, %v495, %v555
        %v557 = vsel %vm546, %v502, %v556
        %v558 = vsel %vm548, %v509, %v557
        %v559 = vsel %vm550, %v516, %v558
        %v560 = vsel %vm552, %v523, %v559
        %v563 = vsel %vm411, %v553, 0.0
        %564 = vadd.xlane.f32.xlu0 %v563
        %v565 = vpop.xlane.xlu0 %564
        %v566 = vsel %vm411, %v560, 0.0
        %567 = vadd.xlane.f32.xlu0 %v566
        %v568 = vpop.xlane.xlu0 %567
        %v571 = vlaneseq
        %v572 = vand.u32 %v571, 127
        %v573 = vlaneseq
        %v574 = vshrl.u32 %v573, 7
        %v575 = vsub.s32 %v572, %v574
        %v576 = vrot.slane %v565, %v575
        %v577 = vadd.s32 %v572, 4294967288
        %v578 = vlaneseq
        %v579 = vshrl.u32 %v578, 7
        %v580 = vsub.s32 %v577, %v579
        %v581 = vrot.slane %v568, %v580
        %vm582 = vcmask 130112
        %v583 = vsel %vm582, %v581, %v576
        %vm585 = vcmask 122880
        %586 = vst.msk [vmem:[%s225] sm:$0x1] %vm585, %v583
        %v587 = vsel %vm379, %v249, 0.0
        %v588 = vsel %vm380, %v249, 0.0
        %v589 = vsel %vm381, %v249, 0.0
        %v590 = vsel %vm382, %v249, 0.0
        %v591 = vsel %vm383, %v249, 0.0
        %v592 = vsel %vm384, %v249, 0.0
        %v593 = vsel %vm385, %v249, 0.0
        %v594 = vsel %vm386, %v249, 0.0
        %v595 = vsel %vm387, %v249, 0.0
        %v596 = vsel %vm388, %v249, 0.0
        %v597 = vsel %vm389, %v249, 0.0
        %v598 = vsel %vm390, %v249, 0.0
        %v599 = vsel %vm391, %v249, 0.0
        %v600 = vsel %vm392, %v249, 0.0
        %v601 = vsel %vm393, %v249, 0.0
        %v602 = vsel %vm394, %v249, 0.0
        %v603 = vsel %vm411, %v587, 0.0
        %v604 = vrot.slane %v603, 4
        %v605 = vadd.f32 %v603, %v604
        %v606 = vrot.slane %v605, 2
        %v607 = vadd.f32 %v605, %v606
        %v608 = vrot.slane %v607, 1
        %v609 = vadd.f32 %v607, %v608
        %v610 = vsel %vm411, %v588, 0.0
        %v611 = vrot.slane %v610, 4
        %v612 = vadd.f32 %v610, %v611
        %v613 = vrot.slane %v612, 2
        %v614 = vadd.f32 %v612, %v613
        %v615 = vrot.slane %v614, 1
        %v616 = vadd.f32 %v614, %v615
        %v617 = vsel %vm411, %v589, 0.0
        %v618 = vrot.slane %v617, 4
        %v619 = vadd.f32 %v617, %v618
        %v620 = vrot.slane %v619, 2
        %v621 = vadd.f32 %v619, %v620
        %v622 = vrot.slane %v621, 1
        %v623 = vadd.f32 %v621, %v622
        %v624 = vsel %vm411, %v590, 0.0
        %v625 = vrot.slane %v624, 4
        %v626 = vadd.f32 %v624, %v625
        %v627 = vrot.slane %v626, 2
        %v628 = vadd.f32 %v626, %v627
        %v629 = vrot.slane %v628, 1
        %v630 = vadd.f32 %v628, %v629
        %v631 = vsel %vm411, %v591, 0.0
        %v632 = vrot.slane %v631, 4
        %v633 = vadd.f32 %v631, %v632
        %v634 = vrot.slane %v633, 2
        %v635 = vadd.f32 %v633, %v634
        %v636 = vrot.slane %v635, 1
        %v637 = vadd.f32 %v635, %v636
        %v638 = vsel %vm411, %v592, 0.0
        %v639 = vrot.slane %v638, 4
        %v640 = vadd.f32 %v638, %v639
        %v641 = vrot.slane %v640, 2
        %v642 = vadd.f32 %v640, %v641
        %v643 = vrot.slane %v642, 1
        %v644 = vadd.f32 %v642, %v643
        %v645 = vsel %vm411, %v593, 0.0
        %v646 = vrot.slane %v645, 4
        %v647 = vadd.f32 %v645, %v646
        %v648 = vrot.slane %v647, 2
        %v649 = vadd.f32 %v647, %v648
        %v650 = vrot.slane %v649, 1
        %v651 = vadd.f32 %v649, %v650
        %v652 = vsel %vm411, %v594, 0.0
        %v653 = vrot.slane %v652, 4
        %v654 = vadd.f32 %v652, %v653
        %v655 = vrot.slane %v654, 2
        %v656 = vadd.f32 %v654, %v655
        %v657 = vrot.slane %v656, 1
        %v658 = vadd.f32 %v656, %v657
        %v659 = vsel %vm411, %v595, 0.0
        %v660 = vrot.slane %v659, 4
        %v661 = vadd.f32 %v659, %v660
        %v662 = vrot.slane %v661, 2
        %v663 = vadd.f32 %v661, %v662
        %v664 = vrot.slane %v663, 1
        %v665 = vadd.f32 %v663, %v664
        %v666 = vsel %vm411, %v596, 0.0
        %v667 = vrot.slane %v666, 4
        %v668 = vadd.f32 %v666, %v667
        %v669 = vrot.slane %v668, 2
        %v670 = vadd.f32 %v668, %v669
        %v671 = vrot.slane %v670, 1
        %v672 = vadd.f32 %v670, %v671
        %v673 = vsel %vm411, %v597, 0.0
        %v674 = vrot.slane %v673, 4
        %v675 = vadd.f32 %v673, %v674
        %v676 = vrot.slane %v675, 2
        %v677 = vadd.f32 %v675, %v676
        %v678 = vrot.slane %v677, 1
        %v679 = vadd.f32 %v677, %v678
        %v680 = vsel %vm411, %v598, 0.0
        %v681 = vrot.slane %v680, 4
        %v682 = vadd.f32 %v680, %v681
        %v683 = vrot.slane %v682, 2
        %v684 = vadd.f32 %v682, %v683
        %v685 = vrot.slane %v684, 1
        %v686 = vadd.f32 %v684, %v685
        %v687 = vsel %vm411, %v599, 0.0
        %v688 = vrot.slane %v687, 4
        %v689 = vadd.f32 %v687, %v688
        %v690 = vrot.slane %v689, 2
        %v691 = vadd.f32 %v689, %v690
        %v692 = vrot.slane %v691, 1
        %v693 = vadd.f32 %v691, %v692
        %v694 = vsel %vm411, %v600, 0.0
        %v695 = vrot.slane %v694, 4
        %v696 = vadd.f32 %v694, %v695
        %v697 = vrot.slane %v696, 2
        %v698 = vadd.f32 %v696, %v697
        %v699 = vrot.slane %v698, 1
        %v700 = vadd.f32 %v698, %v699
        %v701 = vsel %vm411, %v601, 0.0
        %v702 = vrot.slane %v701, 4
        %v703 = vadd.f32 %v701, %v702
        %v704 = vrot.slane %v703, 2
        %v705 = vadd.f32 %v703, %v704
        %v706 = vrot.slane %v705, 1
        %v707 = vadd.f32 %v705, %v706
        %v708 = vsel %vm411, %v602, 0.0
        %v709 = vrot.slane %v708, 4
        %v710 = vadd.f32 %v708, %v709
        %v711 = vrot.slane %v710, 2
        %v712 = vadd.f32 %v710, %v711
        %v713 = vrot.slane %v712, 1
        %v714 = vadd.f32 %v712, %v713
        %v731 = vsel %vm540, %v616, %v609
        %v732 = vsel %vm542, %v623, %v731
        %v733 = vsel %vm544, %v630, %v732
        %v734 = vsel %vm546, %v637, %v733
        %v735 = vsel %vm548, %v644, %v734
        %v736 = vsel %vm550, %v651, %v735
        %v737 = vsel %vm552, %v658, %v736
        %v738 = vsel %vm540, %v672, %v665
        %v739 = vsel %vm542, %v679, %v738
        %v740 = vsel %vm544, %v686, %v739
        %v741 = vsel %vm546, %v693, %v740
        %v742 = vsel %vm548, %v700, %v741
        %v743 = vsel %vm550, %v707, %v742
        %v744 = vsel %vm552, %v714, %v743
        %v747 = vsel %vm411, %v737, 0.0
        %748 = vadd.xlane.f32.xlu0 %v747
        %v749 = vpop.xlane.xlu0 %748
        %v750 = vsel %vm411, %v744, 0.0
        %751 = vadd.xlane.f32.xlu0 %v750
        %v752 = vpop.xlane.xlu0 %751
        %v755 = vlaneseq
        %v756 = vshrl.u32 %v755, 7
        %v757 = vsub.s32 %v572, %v756
        %v758 = vrot.slane %v749, %v757
        %v759 = vlaneseq
        %v760 = vshrl.u32 %v759, 7
        %v761 = vsub.s32 %v577, %v760
        %v762 = vrot.slane %v752, %v761
        %v763 = vsel %vm582, %v762, %v758
        %765 = vst.msk [vmem:[%s225 + $0x1] sm:$0x1] %vm585, %v763
        %s766 = sand.u32 %s119, 1
        %s767 = scalar_lea.sflag [#allocation4], %s766
        %s768 = sand.u32 %s119, 1
        %s769 = smul.addr %s768, 2
        %s770 = scalar_lea.vmem [#allocation5], %s769
        // Predicated region
        $region37: #{tpu_custom_call.1} parent=31 // pred_check
          %p771 = pneg %p129
        $region38: #{tpu_custom_call.1} parent=31 // pred_check_branch
          %773 = sbr.rel (%p771) target = $region40
        $region39: #{tpu_custom_call.1} parent=31 // pred_region
          %s774 = sadd.s32 %s24, %s25
          %s776 = ssub.s32 32, 32
          %777 = vsyncadd %s767, %s776
          %s778 = smul.addr %s774, 32
          %s779 = scalar_lea.hbm %s3, %s778
          %s781 = sshll.u32 %s770, 4
          %s782 = int_to_ptr.vmem [resolvable:$true] %s781
          %784 = dma.vmem_to_hbm [thread:$0]  %s782, 32, %s779, %s767
        $region40: #{tpu_custom_call.1} parent=31 // pred_fallthru
          _
      $region32: #{tpu_custom_call.1} parent=5 // pred_fallthru
        _
      %p785 = scmp.le.s32.totalorder 2, %s15
      // Predicated region
      $region41: #{tpu_custom_call.1} parent=5 // pred_check
        %p786 = pneg %p785
      $region42: #{tpu_custom_call.1} parent=5 // pred_check_branch
        %788 = sbr.rel (%p786) target = $region44
      $region43: #{tpu_custom_call.1} parent=5 // pred_region
        %s789 = ssub.s32 %s15, 2
        // Predicated region
        $region45: #{tpu_custom_call.1} parent=43 // pred_check
          %p790 = pneg %p135
        $region46: #{tpu_custom_call.1} parent=43 // pred_check_branch
          %792 = sbr.rel (%p790) target = $region48
        $region47: #{tpu_custom_call.1} parent=43 // pred_region
          %s793 = sand.u32 %s120, 1
          %s794 = scalar_lea.sflag [#allocation4], %s793
          %s795 = sand.u32 %s120, 1
          %s796 = smul.addr %s795, 2
          %s797 = scalar_lea.vmem [#allocation5], %s796
          %798 = dma.done %s794, 32
        $region48: #{tpu_custom_call.1} parent=43 // pred_fallthru
          _
      $region44: #{tpu_custom_call.1} parent=5 // pred_fallthru
        _
    $region6: #{tpu_custom_call.1} parent=1 // loop_footer
      %s19 = sadd.s32 1, %s15
    $region7: #{tpu_custom_call.1} parent=1 // loop_footer_branch
      %14 = sbr.rel target = $region3
    $region8: #{tpu_custom_call.1} parent=1 // loop_exit
      _
    %799 = vsyncpa [#allocation3], 1
    %s800 = scalar_lea.sflag [#allocation3], 1
    %801 = vsyncpa %s800, 1
    %802 = vsyncpa [#allocation4], 1
    %s803 = scalar_lea.sflag [#allocation4], 1
    %804 = vsyncpa %s803, 1

</llo_original>
